<compile_context>
chip_gen: v7x
topology: tpu7x:2x2x1
jax: 0.10.0
libtpu: 0.0.40
codegen_flags: <defaults>
</compile_context>

<pallas_src>
import functools

import jax
import jax.numpy as jnp
from jax import lax
from jax.experimental import pallas as pl
from jax.experimental.pallas import tpu as pltpu


def _round_up(x, m):
    return ((x + m - 1) // m) * m


def _focal_loss_kernel(x_ref, tgt_ref, alpha_ref, *out_refs,
                       gamma, gamma_int, tile_n, n_total,
                       need_per, need_sum, need_norm):
    # x_ref: (TILE_N, C) logits (native dtype), tgt_ref: (TILE_N, 1) i32,
    # alpha_ref: (1, C) f32 class weights.
    x = x_ref[...].astype(jnp.float32)
    tgt = tgt_ref[...]
    a = alpha_ref[...].astype(jnp.float32)
    t_rows, c = x.shape

    # Numerically stable softmax normalizer (the only full-width math).
    m = jnp.max(x, axis=1, keepdims=True)
    z = x - m                                              # (T, C)
    denom = jnp.sum(jnp.exp(z), axis=1, keepdims=True)     # (T, 1)

    # Gather the target class via one-hot mask + lane reduction.
    cls_ids = lax.broadcasted_iota(jnp.int32, (t_rows, c), 1)
    onehot = (cls_ids == tgt).astype(jnp.float32)          # (T, C)
    z_t = jnp.sum(z * onehot, axis=1, keepdims=True)       # (T, 1)
    a_t = jnp.sum(a * onehot, axis=1, keepdims=True)       # (T, 1)

    # Focal term for the target class only (all (T, 1) work).
    log_p_t = z_t - jnp.log(denom)                         # log softmax[target]
    p_t = jnp.exp(log_p_t)                                 # softmax[target]
    one_minus_p = 1.0 - p_t
    if gamma_int is not None:
        w = jnp.ones_like(one_minus_p)
        for _ in range(gamma_int):                         # unrolled VPU muls
            w = w * one_minus_p
    else:
        w = one_minus_p ** gamma                           # EUP exp+log fallback
    per = -a_t * w * log_p_t                               # (T, 1)

    # Mask rows of a (possibly partial) last tile.
    row = pl.program_id(0) * tile_n + lax.broadcasted_iota(
        jnp.int32, (t_rows, 1), 0)
    in_bounds = row < n_total
    per_masked = jnp.where(in_bounds, per, 0.0)

    idx = 0
    if need_per:
        out_refs[idx][...] = per_masked.astype(out_refs[idx].dtype)
        idx += 1
    if need_sum or need_norm:
        # Partial-sum tile: value at [0, 0], zeros elsewhere (legal (8, 128)
        # output block; wrapper sums everything).
        r8 = lax.broadcasted_iota(jnp.int32, (8, 128), 0)
        c128 = lax.broadcasted_iota(jnp.int32, (8, 128), 1)
        at00 = (r8 == 0) & (c128 == 0)
    if need_sum:
        out_refs[idx][...] = jnp.where(at00, jnp.sum(per_masked), 0.0)
        idx += 1
    if need_norm:
        a_masked = jnp.where(in_bounds, a_t, 0.0)
        out_refs[idx][...] = jnp.where(at00, jnp.sum(a_masked), 0.0)
        idx += 1


def focal_loss(logits, target, alpha, gamma, reduction="sum"):
    """logits: (N, C) float (f32 or bf16), target: (N,) int, alpha: (C,) float."""
    assert reduction in ("mean", "none", "sum")
    n, c = logits.shape
    alpha2d = alpha.reshape(1, c).astype(jnp.float32)
    tgt2d = target.reshape(n, 1).astype(jnp.int32)

    # Row tile: ~2 MiB of logits per tile (double-buffered -> ~4 MiB, plus a
    # few (TILE_N, C) f32 temporaries stays well under the 32 MiB scoped VMEM
    # budget, v7x included).  Multiple of 8, capped at 1024 rows.
    itemsize = jnp.dtype(logits.dtype).itemsize
    tile_n = (2 * 1024 * 1024) // max(c * itemsize, 1)
    tile_n = max(8, min(1024, (tile_n // 8) * 8))
    tile_n = min(tile_n, _round_up(n, 8))
    num_tiles = pl.cdiv(n, tile_n)

    need_per = reduction == "none"
    need_sum = reduction in ("sum", "mean")
    need_norm = reduction == "mean"

    gamma_int = None
    if float(gamma) == float(int(gamma)) and 0 <= int(gamma) <= 8:
        gamma_int = int(gamma)

    kernel = functools.partial(
        _focal_loss_kernel, gamma=float(gamma), gamma_int=gamma_int,
        tile_n=tile_n, n_total=n, need_per=need_per, need_sum=need_sum,
        need_norm=need_norm)

    out_shapes = []
    out_specs = []
    if need_per:
        out_shapes.append(jax.ShapeDtypeStruct((n, 1), jnp.float32))
        out_specs.append(pl.BlockSpec((tile_n, 1), lambda i: (i, 0)))
    if need_sum:
        out_shapes.append(jax.ShapeDtypeStruct((num_tiles * 8, 128), jnp.float32))
        out_specs.append(pl.BlockSpec((8, 128), lambda i: (i, 0)))
    if need_norm:
        out_shapes.append(jax.ShapeDtypeStruct((num_tiles * 8, 128), jnp.float32))
        out_specs.append(pl.BlockSpec((8, 128), lambda i: (i, 0)))

    outs = pl.pallas_call(
        kernel,
        out_shape=tuple(out_shapes),
        grid_spec=pltpu.PrefetchScalarGridSpec(
            num_scalar_prefetch=0,
            grid=(num_tiles,),
            in_specs=[
                pl.BlockSpec((tile_n, c), lambda i: (i, 0)),   # logits (native dtype)
                pl.BlockSpec((tile_n, 1), lambda i: (i, 0)),   # target ids
                pl.BlockSpec((1, c), lambda i: (0, 0)),        # alpha (broadcast)
            ],
            out_specs=tuple(out_specs),
        ),
        compiler_params=pltpu.CompilerParams(
            dimension_semantics=("parallel",),
            vmem_limit_bytes=32 * 1024 * 1024,
        ),
    )(logits, tgt2d, alpha2d)

    if reduction == "none":
        return outs[0][:, 0]
    elif reduction == "sum":
        return jnp.sum(outs[0])
    else:  # mean: (per / norm).sum() == per.sum() / norm
        return jnp.sum(outs[0]) / jnp.sum(outs[1])


def _focal_loss_ref(logits, target, alpha, gamma, reduction="sum"):
    logits = logits.astype(jnp.float32)
    a = alpha.reshape(1, -1)
    log_y = jax.nn.log_softmax(logits, axis=1)
    y = jax.nn.softmax(logits, axis=1)
    pel = -a * (1.0 - y) ** gamma * log_y
    per = pel[jnp.arange(logits.shape[0]), target]
    if reduction == "none":
        return per
    elif reduction == "sum":
        return per.sum()
    else:
        return (per / a[0, target].sum()).sum()


if __name__ == "__main__":
    key = jax.random.PRNGKey(0)
    k1, k2 = jax.random.split(key)

    num_classes = 4
    n = 8
    gamma = 2.0
    reduction = "sum"  # module default

    logits = jax.random.normal(k1, (n, num_classes), dtype=jnp.float32)
    target = jax.random.randint(k2, (n,), 0, num_classes, dtype=jnp.int32)
    alpha = jnp.array([0.1, 0.2, 0.3, 0.4], dtype=jnp.float32)

    out = focal_loss(logits, target, alpha, gamma, reduction)
    out = jax.block_until_ready(out)

    ref = _focal_loss_ref(logits, target, alpha, gamma, reduction)
    assert jnp.allclose(out, ref, rtol=1e-5, atol=1e-5), (out, ref)

    # also sanity-check the other reductions against the reference
    for red in ("none", "mean"):
        o = jax.block_until_ready(focal_loss(logits, target, alpha, gamma, red))
        r = _focal_loss_ref(logits, target, alpha, gamma, red)
        assert jnp.allclose(o, r, rtol=1e-5, atol=1e-5), (red, o, r)

    print("KERNEL_OK")
</pallas_src>

<mosaic_0001>
module attributes {stable_mosaic.version = 11 : i64} {
  func.func @_focal_loss_kernel(%arg0: i32, %arg1: memref<8x4xf32, #tpu.memory_space<vmem>>, %arg2: memref<8x1xi32, #tpu.memory_space<vmem>>, %arg3: memref<1x4xf32, #tpu.memory_space<vmem>>, %arg4: memref<8x128xf32, #tpu.memory_space<vmem>>) attributes {dimension_semantics = [#tpu.dimension_semantics<parallel>], iteration_bounds = array<i64: 1>, scalar_prefetch = 0 : i64, scratch_operands = 0 : i64, tpu.core_type = #tpu.core_type<tc>, window_params = [{transform_indices = @transform_0, window_bounds = array<i64: 8, 4>}, {transform_indices = @transform_1, window_bounds = array<i64: 8, 1>}, {pipeline_mode = #tpu.pipeline_mode<synchronous>, transform_indices = @transform_2, window_bounds = array<i64: 1, 4>}, {transform_indices = @transform_3, window_bounds = array<i64: 8, 128>}]} {
    %c0 = arith.constant 0 : index
    %c0_0 = arith.constant 0 : index
    %0 = vector.load %arg1[%c0, %c0_0] : memref<8x4xf32, #tpu.memory_space<vmem>>, vector<8x4xf32>
    %c0_1 = arith.constant 0 : index
    %c0_2 = arith.constant 0 : index
    %1 = vector.load %arg2[%c0_1, %c0_2] : memref<8x1xi32, #tpu.memory_space<vmem>>, vector<8x1xi32>
    %c0_3 = arith.constant 0 : index
    %c0_4 = arith.constant 0 : index
    %2 = vector.load %arg3[%c0_3, %c0_4] : memref<1x4xf32, #tpu.memory_space<vmem>>, vector<1x4xf32>
    %cst = arith.constant dense<0xFF800000> : vector<8xf32>
    %3 = vector.multi_reduction <maximumf>, %0, %cst [1] : vector<8x4xf32> to vector<8xf32>
    %4 = vector.shape_cast %3 : vector<8xf32> to vector<8x1xf32>
    %5 = vector.broadcast %4 : vector<8x1xf32> to vector<8x4xf32>
    %6 = arith.subf %0, %5 : vector<8x4xf32>
    %7 = math.exp %6 : vector<8x4xf32>
    %cst_5 = arith.constant dense<0.000000e+00> : vector<8xf32>
    %8 = vector.multi_reduction <add>, %7, %cst_5 [1] : vector<8x4xf32> to vector<8xf32>
    %9 = vector.shape_cast %8 : vector<8xf32> to vector<8x1xf32>
    %10 = tpu.iota {dimensions = array<i32: 1>} : vector<8x4xi32>
    %11 = vector.broadcast %1 : vector<8x1xi32> to vector<8x4xi32>
    %12 = arith.cmpi eq, %10, %11 : vector<8x4xi32>
    %13 = arith.extui %12 : vector<8x4xi1> to vector<8x4xi32>
    %14 = arith.sitofp %13 : vector<8x4xi32> to vector<8x4xf32>
    %15 = arith.mulf %6, %14 : vector<8x4xf32>
    %cst_6 = arith.constant dense<0.000000e+00> : vector<8xf32>
    %16 = vector.multi_reduction <add>, %15, %cst_6 [1] : vector<8x4xf32> to vector<8xf32>
    %17 = vector.shape_cast %16 : vector<8xf32> to vector<8x1xf32>
    %18 = vector.broadcast %2 : vector<1x4xf32> to vector<8x4xf32>
    %19 = arith.mulf %18, %14 : vector<8x4xf32>
    %cst_7 = arith.constant dense<0.000000e+00> : vector<8xf32>
    %20 = vector.multi_reduction <add>, %19, %cst_7 [1] : vector<8x4xf32> to vector<8xf32>
    %21 = vector.shape_cast %20 : vector<8xf32> to vector<8x1xf32>
    %22 = math.log %9 : vector<8x1xf32>
    %23 = arith.subf %17, %22 : vector<8x1xf32>
    %24 = math.exp %23 : vector<8x1xf32>
    %cst_8 = arith.constant 1.000000e+00 : f32
    %25 = vector.broadcast %cst_8 : f32 to vector<8x1xf32>
    %26 = arith.subf %25, %24 : vector<8x1xf32>
    %cst_9 = arith.constant 1.000000e+00 : f32
    %27 = vector.broadcast %cst_9 : f32 to vector<8x1xf32>
    %28 = arith.mulf %27, %26 : vector<8x1xf32>
    %29 = arith.mulf %28, %26 : vector<8x1xf32>
    %cst_10 = arith.constant 0.000000e+00 : f32
    %30 = vector.broadcast %cst_10 : f32 to vector<8x1xf32>
    %31 = arith.subf %30, %21 : vector<8x1xf32>
    %32 = arith.mulf %31, %29 : vector<8x1xf32>
    %33 = arith.mulf %32, %23 : vector<8x1xf32>
    %c8_i32 = arith.constant 8 : i32
    %34 = arith.muli %arg0, %c8_i32 : i32
    %35 = tpu.iota {dimensions = array<i32: 0>} : vector<8x1xi32>
    %36 = vector.broadcast %34 : i32 to vector<8x1xi32>
    %37 = arith.addi %36, %35 : vector<8x1xi32>
    %c8_i32_11 = arith.constant 8 : i32
    %38 = vector.broadcast %c8_i32_11 : i32 to vector<8x1xi32>
    %39 = arith.cmpi slt, %37, %38 : vector<8x1xi32>
    %cst_12 = arith.constant 0.000000e+00 : f32
    %40 = vector.broadcast %cst_12 : f32 to vector<8x1xf32>
    %41 = arith.select %39, %33, %40 : vector<8x1xi1>, vector<8x1xf32>
    %42 = tpu.iota {dimensions = array<i32: 0>} : vector<8x128xi32>
    %43 = tpu.iota {dimensions = array<i32: 1>} : vector<8x128xi32>
    %c0_i32 = arith.constant 0 : i32
    %44 = vector.broadcast %c0_i32 : i32 to vector<8x128xi32>
    %45 = arith.cmpi eq, %42, %44 : vector<8x128xi32>
    %c0_i32_13 = arith.constant 0 : i32
    %46 = vector.broadcast %c0_i32_13 : i32 to vector<8x128xi32>
    %47 = arith.cmpi eq, %43, %46 : vector<8x128xi32>
    %48 = arith.andi %45, %47 : vector<8x128xi1>
    %49 = vector.shape_cast %41 : vector<8x1xf32> to vector<1x8x1xf32>
    %cst_14 = arith.constant dense<0.000000e+00> : vector<1xf32>
    %50 = vector.multi_reduction <add>, %49, %cst_14 [1, 2] : vector<1x8x1xf32> to vector<1xf32>
    %51 = vector.shape_cast %50 : vector<1xf32> to vector<1x1x1xf32>
    %52 = vector.extract %51[0, 0, 0] : f32 from vector<1x1x1xf32>
    %cst_15 = arith.constant 0.000000e+00 : f32
    %53 = vector.broadcast %52 : f32 to vector<8x128xf32>
    %54 = vector.broadcast %cst_15 : f32 to vector<8x128xf32>
    %55 = arith.select %48, %53, %54 : vector<8x128xi1>, vector<8x128xf32>
    %c0_16 = arith.constant 0 : index
    %c0_17 = arith.constant 0 : index
    %56 = vector.load %arg4[%c0_16, %c0_17] : memref<8x128xf32, #tpu.memory_space<vmem>>, vector<8x128xf32>
    tpu.vector_store %arg4[%c0_16, %c0_17], %55 {strides = array<i32>} : memref<8x128xf32, #tpu.memory_space<vmem>>, vector<8x128xf32>,
    return
  }
  func.func @transform_0(%arg0: i32) -> (i32, i32) {
    %c0_i32 = arith.constant 0 : i32
    %c0_i32_0 = arith.constant 0 : i32
    return %arg0, %c0_i32 : i32, i32
  }
  func.func @transform_1(%arg0: i32) -> (i32, i32) {
    %c0_i32 = arith.constant 0 : i32
    %c0_i32_0 = arith.constant 0 : i32
    return %arg0, %c0_i32 : i32, i32
  }
  func.func @transform_2(%arg0: i32) -> (i32, i32) {
    %c0_i32 = arith.constant 0 : i32
    %c0_i32_0 = arith.constant 0 : i32
    %c0_i32_1 = arith.constant 0 : i32
    return %c0_i32, %c0_i32_0 : i32, i32
  }
  func.func @transform_3(%arg0: i32) -> (i32, i32) {
    %c0_i32 = arith.constant 0 : i32
    %c0_i32_0 = arith.constant 0 : i32
    return %arg0, %c0_i32 : i32, i32
  }
}

</mosaic_0001>

<llo_original>
// kernel: tpu_custom_call.1
$region0: #{tpu_custom_call.1}
  #allocation0 [shape = 'u32[]', space=smem, size = 0x4, offset = 0x4, fixed_abs, tag = 'smem constant byte address 0x4 - core index']
  #allocation1 [shape = 'u32[144,128]{1,0:T(1,128)}', space=vmem, size = 0x12000, scoped, tag = 'internal scratch']
  %s0 = inlined_call_operand.vmem [shape: f32[8,4], index: 0, kind: input, shape index: {}]
  %s1 = inlined_call_operand.vmem [shape: s32[8,1], index: 1, kind: input, shape index: {}]
  %s2 = inlined_call_operand.vmem [shape: f32[1,4], index: 2, kind: input, shape index: {}]
  %s3 = inlined_call_operand.hbm [shape: f32[8,128], index: 3, kind: output, shape index: {}]
  %s4 = sld [smem:[#allocation0]]
  $region22: #{tpu_custom_call.1} parent=0
    _
  %s6 = ssub.s32 1, %s4
  %s7 = scalar_select 0, %s6, %s4
  $region1: #{tpu_custom_call.1} parent=0
    #allocation2 [shape = 'u8[4096]{0}', space=vmem, size = 0x1000, scoped, tag = 'output window, operand 0, single buffered']
    #allocation3 [shape = 's32[1]{0}', space=sflag, size = 0x4, scoped, tag = 'scoped memory for tpu_custom_call.1']
    %8 = vsyncpa [#allocation3], 0
    // Predicated region
    $region2: #{tpu_custom_call.1} parent=1 // pred_check
      _
    $region3: #{tpu_custom_call.1} parent=1 // pred_check_branch
      %10 = sbr.rel (0) target = $region5
    $region4: #{tpu_custom_call.1} parent=1 // pred_region
      _
    $region5: #{tpu_custom_call.1} parent=1 // pred_fallthru
      _
    // Predicated region
    $region6: #{tpu_custom_call.1} parent=1 // pred_check
      _
    $region7: #{tpu_custom_call.1} parent=1 // pred_check_branch
      %12 = sbr.rel (0) target = $region9
    $region8: #{tpu_custom_call.1} parent=1 // pred_region
      _
    $region9: #{tpu_custom_call.1} parent=1 // pred_fallthru
      _
    // Predicated region
    $region10: #{tpu_custom_call.1} parent=1 // pred_check
      _
    $region11: #{tpu_custom_call.1} parent=1 // pred_check_branch
      %14 = sbr.rel (0) target = $region13
    $region12: #{tpu_custom_call.1} parent=1 // pred_region
      _
    $region13: #{tpu_custom_call.1} parent=1 // pred_fallthru
      _
    %v15 = vld [vmem:[%s0] sm:$0xff]
    %v16 = vld [vmem:[%s1] sm:$0xff]
    %v17 = vld [vmem:[%s2] sm:$0x1]
    %vm18 = vcmask 31744
    %v19 = vsel %vm18, %v15, -inf
    %20 = vmax.xlane.f32.xlu0 %v19
    %v21 = vpop.xlane.xlu0 %20
    %v22 = vsub.f32 %v15, %v21
    %v23 = vmul.f32 %v22, 1.442695
    %v24 = vpow.pop %v23
    %v25 = vsel %vm18, %v24, 0.0
    %26 = vadd.xlane.f32.xlu0 %v25
    %v27 = vpop.xlane.xlu0 %26
    %v28 = vlaneseq
    %v29 = vand.u32 %v28, 127
    %30 = vset.pattern.permute.xlu0 0
    %31 = vperm.xlu0 %30, %v16
    %v32 = vpop.permute.xlu0 %31
    %vm33 = vcmp.eq.s32.totalorder %v29, %v32
    %v34 = vsel %vm33, 1, 0
    %v35 = vcvt.s32.f32 %v34
    %v36 = vmul.f32 %v22, %v35
    %v37 = vsel %vm18, %v36, 0.0
    %38 = vadd.xlane.f32.xlu0 %v37
    %v39 = vpop.xlane.xlu0 %38
    %v41 = vlaneseq
    %v42 = vshrl.u32 %v41, 7
    %v43 = vsub.s32 0, %v42
    %v44 = vrot.slane %v17, %v43
    %v46 = vmul.f32 %v44, %v35
    %v47 = vsel %vm18, %v46, 0.0
    %48 = vadd.xlane.f32.xlu0 %v47
    %v49 = vpop.xlane.xlu0 %48
    %v50 = vlog2.pop %v27
    %v51 = vmul.f32 %v50, 0.6931472
    %v52 = vsub.f32 %v39, %v51
    %v53 = vmul.f32 %v52, 1.442695
    %v54 = vpow.pop %v53
    %v55 = vsub.f32 1.0, %v54
    %v56 = vmul.f32 %v55, %v55
    %v57 = vsub.f32 0.0, %v49
    %v58 = vmul.f32 %v57, %v56
    %v59 = vmul.f32 %v58, %v52
    %s60 = smul.u32 0, 8
    %v61 = vlaneseq
    %v62 = vshrl.u32 %v61, 7
    %v63 = vstv %s60
    %v64 = vadd.s32 %v63, %v62
    %vm65 = vcmp.lt.s32.totalorder %v64, 8
    %v66 = vsel %vm65, %v59, 0.0
    %vm67 = vcmp.eq.s32.totalorder %v62, 0
    %vm68 = vcmp.eq.s32.totalorder %v29, 0
    %vm69 = vmand %vm67, %vm68
    %vm70 = vcmask 7168
    %v71 = vsel %vm70, %v66, 0.0
    %72 = vadd.xlane.f32.xlu0 %v71
    %v73 = vpop.xlane.xlu0 %72
    %v74 = vrot.slane %v73, 4
    %v75 = vadd.f32 %v73, %v74
    %v76 = vrot.slane %v75, 2
    %v77 = vadd.f32 %v75, %v76
    %v78 = vrot.slane %v77, 1
    %v79 = vadd.f32 %v77, %v78
    %s80 = vtos %v79
    %v81 = vstv %s80
    %v82 = vsel %vm69, %v81, 0.0
    %83 = vst [vmem:[#allocation2] sm:$0xff] %v82
    // Predicated region
    $region14: #{tpu_custom_call.1} parent=1 // pred_check
      _
    $region15: #{tpu_custom_call.1} parent=1 // pred_check_branch
      %85 = sbr.rel (0) target = $region17
    $region16: #{tpu_custom_call.1} parent=1 // pred_region
      %s87 = ssub.s32 128, 128
      %88 = vsyncadd [#allocation3], %s87
      %s90 = sshll.u32 [#allocation2], 4
      %s91 = int_to_ptr.vmem [resolvable:$true] %s90
      %93 = dma.vmem_to_hbm [thread:$0]  %s91, 128, %s3, [#allocation3]
    $region17: #{tpu_custom_call.1} parent=1 // pred_fallthru
      _
    // Predicated region
    $region18: #{tpu_custom_call.1} parent=1 // pred_check
      _
    $region19: #{tpu_custom_call.1} parent=1 // pred_check_branch
      %95 = sbr.rel (0) target = $region21
    $region20: #{tpu_custom_call.1} parent=1 // pred_region
      %96 = dma.done [#allocation3], 128
    $region21: #{tpu_custom_call.1} parent=1 // pred_fallthru
      _
    %97 = vsyncpa [#allocation3], 1

</llo_original>
